<compile_context>
chip_gen: v6e
topology: v6e:2x2x1
jax: 0.10.0
libtpu: 0.0.40
codegen_flags: <defaults>
</compile_context>

<pallas_src>
import jax
import jax.numpy as jnp
from jax import lax
from jax.experimental import pallas as pl
from jax.experimental.pallas import tpu as pltpu

# dot_general dimension_numbers for x @ W.T with W kept in PyTorch (out, in)
# layout — contraction on the last dim of both, so no transposes materialize.
_CONTRACT_WT = (((1,), (1,)), ((), ()))


def cross_modal_kernel(visual_ref, audio_ref, wv_ref, wa_ref, out_ref):
    """out_ref: (2, tb, n_pad). Index 0 = visual slab, index 1 = audio slab.

    Columns [:64] of each slab are the shared-space features, columns
    [64:64+class_num] are the classifier logits, the rest is zero padding that
    keeps the output store unmasked and 128-lane dense.
    """
    out_ref[0] = lax.dot_general(
        visual_ref[...], wv_ref[...], _CONTRACT_WT,
        preferred_element_type=jnp.float32).astype(out_ref.dtype)
    out_ref[1] = lax.dot_general(
        audio_ref[...], wa_ref[...], _CONTRACT_WT,
        preferred_element_type=jnp.float32).astype(out_ref.dtype)


def _full_spec(arr):
    """Weight-resident full-array block (same block every grid step)."""
    zeros = (0,) * arr.ndim
    return pl.BlockSpec(arr.shape, lambda i: zeros)


def _vmem_capacity_bytes():
    """Physical per-core VMEM; conservative v7x fallback if the query fails."""
    try:
        return int(pltpu.get_tpu_info().vmem_capacity_bytes)
    except Exception:
        return 64 * 1024 * 1024


def _choose_batch_tile(b_pad8, input_dim, out_dim, n_pad, in_sz, out_sz,
                       vmem_limit, weight_bytes):
    """Batch tile from a VMEM budget, multiple of 8, keeping >=2 grid steps
    (>=4 for larger batches) so v7x's two TensorCores both get work and the
    BlockSpec pipeline can actually overlap DMA with compute."""
    budget = max(2 * 1024 * 1024, int(vmem_limit * 0.6) - weight_bytes)
    # Per batch-row cost: double-buffered bf16 inputs + double-buffered output
    # block (2 modalities x n_pad lanes).
    per_row = 2 * (input_dim + out_dim) * in_sz + 2 * (2 * n_pad) * out_sz
    tb_vmem = max(8, (budget // per_row) // 8 * 8)

    if b_pad8 >= 64:
        target_steps = 4
    elif b_pad8 >= 16:
        target_steps = 2
    else:
        target_steps = 1
    tb_steps = max(8, (b_pad8 // target_steps) // 8 * 8)

    return int(min(tb_vmem, tb_steps, b_pad8))


def cross_modal_base_forward(visual, audio, w1, w2, ws, wc,
                             compute_dtype=jnp.bfloat16):
    """Forward pass of cross_modal_base (bias-free Linears, no activations).

    visual: (B, input_dim)     audio: (B, out_dim)
    w1: (mid_dim, input_dim)   w2: (out_dim, mid_dim)
    ws: (64, out_dim)          wc: (class_num, 64)   -- PyTorch Linear layout
    Returns (feature_visual, feature_audio, final_classifier_v, final_classifier_a).
    """
    B, input_dim = visual.shape
    out_dim = audio.shape[1]
    shared_dim = ws.shape[0]          # 64 (hardcoded in the module)
    class_num = wc.shape[0]
    out_dtype = visual.dtype

    # ---- Pre-compose + stack + pad weights (exact: no bias / nonlinearity;
    # tiny, amortizable at init).  Composition done in f32, streamed as bf16.
    w_vis = jnp.dot(jnp.dot(ws, w2), w1)              # (64, input_dim)
    w_cls_vis = jnp.dot(wc, w_vis)                    # (C, input_dim)
    w_cls_aud = jnp.dot(wc, ws)                       # (C, out_dim)

    n_rows = shared_dim + class_num
    n_pad = max(128, pl.cdiv(n_rows, 128) * 128)      # lane-dense output width

    def stack_pad(top, bot, in_dim):
        w = jnp.zeros((n_pad, in_dim), jnp.float32)
        w = w.at[:shared_dim].set(top.astype(jnp.float32))
        w = w.at[shared_dim:n_rows].set(bot.astype(jnp.float32))
        return w.astype(compute_dtype)

    wv_stack = stack_pad(w_vis, w_cls_vis, input_dim)  # (n_pad, input_dim)
    wa_stack = stack_pad(ws, w_cls_aud, out_dim)       # (n_pad, out_dim)

    # ---- Per-generation VMEM budget, scoped-limit override, batch tile ----
    in_sz = jnp.dtype(compute_dtype).itemsize
    out_sz = jnp.dtype(out_dtype).itemsize
    vmem_cap = _vmem_capacity_bytes()                          # 64 MiB on v7x, 128 on v5e/v6e
    vmem_limit = min(int(vmem_cap * 3 // 4), 100 * 1024 * 1024)  # lift 16/32 MiB defaults
    weight_bytes = 2 * (wv_stack.size + wa_stack.size) * in_sz  # full blocks, 2x buffered

    b_pad8 = ((B + 7) // 8) * 8
    tb = _choose_batch_tile(b_pad8, input_dim, out_dim, n_pad, in_sz, out_sz,
                            vmem_limit, weight_bytes)
    B_pad = pl.cdiv(b_pad8, tb) * tb
    grid = (B_pad // tb,)

    def prep(x):
        x = x.astype(compute_dtype)
        if B_pad != B:
            x = jnp.pad(x, ((0, B_pad - B), (0, 0)))   # zero rows -> zero outputs
        return x

    visual_c = prep(visual)
    audio_c = prep(audio)

    # Advisory cost hint for XLA scheduling around the custom call.
    flops = 2 * B_pad * n_pad * (input_dim + out_dim)
    bytes_accessed = (in_sz * (visual_c.size + audio_c.size
                               + wv_stack.size + wa_stack.size)
                      + out_sz * 2 * B_pad * n_pad)

    out = pl.pallas_call(
        cross_modal_kernel,
        out_shape=jax.ShapeDtypeStruct((2, B_pad, n_pad), out_dtype),
        grid=grid,
        in_specs=[
            pl.BlockSpec((tb, input_dim), lambda i: (i, 0)),   # visual rows
            pl.BlockSpec((tb, out_dim), lambda i: (i, 0)),     # audio rows
            _full_spec(wv_stack),                              # weights resident
            _full_spec(wa_stack),                              # every grid step
        ],
        out_specs=pl.BlockSpec((2, tb, n_pad), lambda i: (0, i, 0)),
        compiler_params=pltpu.CompilerParams(
            dimension_semantics=("parallel",),     # batch axis shards across TCs
            vmem_limit_bytes=vmem_limit,
        ),
        cost_estimate=pl.CostEstimate(flops=flops, transcendentals=0,
                                      bytes_accessed=bytes_accessed),
    )(visual_c, audio_c, wv_stack, wa_stack)

    feature_visual = out[0, :B, :shared_dim]
    feature_audio = out[1, :B, :shared_dim]
    final_classifier_v = out[0, :B, shared_dim:n_rows]
    final_classifier_a = out[1, :B, shared_dim:n_rows]
    return feature_visual, feature_audio, final_classifier_v, final_classifier_a


if __name__ == "__main__":
    # Small shapes consistent with the module's forward:
    #   visual: (B, input_dim), audio: (B, out_dim)  [shared_layer expects out_dim]
    B, input_dim, mid_dim, out_dim, class_num = 8, 64, 32, 16, 10
    shared_dim = 64  # hardcoded in the module (shared_layer -> 64)

    key = jax.random.PRNGKey(0)
    k_v, k_a, k1, k2, k3, k4 = jax.random.split(key, 6)

    visual = jax.random.normal(k_v, (B, input_dim), jnp.float32)
    audio = jax.random.normal(k_a, (B, out_dim), jnp.float32)

    # Deterministic weights in PyTorch nn.Linear layout (out_features, in_features).
    def init_w(k, out_f, in_f):
        bound = 1.0 / jnp.sqrt(in_f)
        return jax.random.uniform(k, (out_f, in_f), jnp.float32, -bound, bound)

    w1 = init_w(k1, mid_dim, input_dim)     # visual_layer_1 (bias=False)
    w2 = init_w(k2, out_dim, mid_dim)       # visual_layer_2 (bias=False)
    ws = init_w(k3, shared_dim, out_dim)    # shared_layer   (bias=False)
    wc = init_w(k4, class_num, shared_dim)  # classifier     (bias=False)

    fv, fa, cv, ca = cross_modal_base_forward(visual, audio, w1, w2, ws, wc)
    jax.block_until_ready((fv, fa, cv, ca))

    # Pure-JAX reference (same semantics as the PyTorch module: bias-free
    # Linears, no nonlinearities).  Tolerances account for the bf16 streaming
    # precision and the exact (but reassociated) weight pre-composition.
    fv_ref = ((visual @ w1.T) @ w2.T) @ ws.T
    cv_ref = fv_ref @ wc.T
    fa_ref = audio @ ws.T
    ca_ref = fa_ref @ wc.T
    assert fv.shape == fv_ref.shape and cv.shape == cv_ref.shape
    assert fa.shape == fa_ref.shape and ca.shape == ca_ref.shape
    assert jnp.allclose(fv, fv_ref, atol=5e-2, rtol=5e-2)
    assert jnp.allclose(fa, fa_ref, atol=5e-2, rtol=5e-2)
    assert jnp.allclose(cv, cv_ref, atol=5e-2, rtol=5e-2)
    assert jnp.allclose(ca, ca_ref, atol=5e-2, rtol=5e-2)

    print("KERNEL_OK")
</pallas_src>

<mosaic_0001>
module attributes {stable_mosaic.version = 11 : i64} {
  func.func @cross_modal_kernel(%arg0: i32, %arg1: memref<8x64xbf16, #tpu.memory_space<vmem>>, %arg2: memref<8x16xbf16, #tpu.memory_space<vmem>>, %arg3: memref<128x64xbf16, #tpu.memory_space<vmem>>, %arg4: memref<128x16xbf16, #tpu.memory_space<vmem>>, %arg5: memref<2x8x128xf32, #tpu.memory_space<vmem>>) attributes {dimension_semantics = [#tpu.dimension_semantics<parallel>], iteration_bounds = array<i64: 1>, scalar_prefetch = 0 : i64, scratch_operands = 0 : i64, tpu.core_type = #tpu.core_type<tc>, window_params = [{transform_indices = @transform_0, window_bounds = array<i64: 8, 64>}, {transform_indices = @transform_1, window_bounds = array<i64: 8, 16>}, {pipeline_mode = #tpu.pipeline_mode<synchronous>, transform_indices = @transform_2, window_bounds = array<i64: 128, 64>}, {pipeline_mode = #tpu.pipeline_mode<synchronous>, transform_indices = @transform_3, window_bounds = array<i64: 128, 16>}, {transform_indices = @transform_4, window_bounds = array<i64: 2, 8, 128>}]} {
    %c0 = arith.constant 0 : index
    %c0_0 = arith.constant 0 : index
    %0 = vector.load %arg1[%c0, %c0_0] : memref<8x64xbf16, #tpu.memory_space<vmem>>, vector<8x64xbf16>
    %c0_1 = arith.constant 0 : index
    %c0_2 = arith.constant 0 : index
    %1 = vector.load %arg3[%c0_1, %c0_2] : memref<128x64xbf16, #tpu.memory_space<vmem>>, vector<128x64xbf16>
    %cst = arith.constant dense<0.000000e+00> : vector<8x128xf32>
    %2 = tpu.matmul %0, %1, %cst {dimension_numbers = #tpu.dot_dimension_numbers<[1], [1], [0], [0], [0, 0, 1, 0], [], []>} : vector<8x64xbf16>, vector<128x64xbf16>, vector<8x128xf32> -> vector<8x128xf32>
    %c0_3 = arith.constant 0 : index
    %c0_4 = arith.constant 0 : index
    %c0_5 = arith.constant 0 : index
    %3 = vector.load %arg5[%c0_3, %c0_4, %c0_5] : memref<2x8x128xf32, #tpu.memory_space<vmem>>, vector<1x8x128xf32>
    %4 = vector.shape_cast %3 : vector<1x8x128xf32> to vector<8x128xf32>
    %5 = vector.shape_cast %2 : vector<8x128xf32> to vector<1x8x128xf32>
    tpu.vector_store %arg5[%c0_3, %c0_4, %c0_5], %5 {strides = array<i32>} : memref<2x8x128xf32, #tpu.memory_space<vmem>>, vector<1x8x128xf32>,
    %c0_6 = arith.constant 0 : index
    %c0_7 = arith.constant 0 : index
    %6 = vector.load %arg2[%c0_6, %c0_7] : memref<8x16xbf16, #tpu.memory_space<vmem>>, vector<8x16xbf16>
    %c0_8 = arith.constant 0 : index
    %c0_9 = arith.constant 0 : index
    %7 = vector.load %arg4[%c0_8, %c0_9] : memref<128x16xbf16, #tpu.memory_space<vmem>>, vector<128x16xbf16>
    %cst_10 = arith.constant dense<0.000000e+00> : vector<8x128xf32>
    %8 = tpu.matmul %6, %7, %cst_10 {dimension_numbers = #tpu.dot_dimension_numbers<[1], [1], [0], [0], [0, 0, 1, 0], [], []>} : vector<8x16xbf16>, vector<128x16xbf16>, vector<8x128xf32> -> vector<8x128xf32>
    %c1 = arith.constant 1 : index
    %c0_11 = arith.constant 0 : index
    %c0_12 = arith.constant 0 : index
    %9 = vector.load %arg5[%c1, %c0_11, %c0_12] : memref<2x8x128xf32, #tpu.memory_space<vmem>>, vector<1x8x128xf32>
    %10 = vector.shape_cast %9 : vector<1x8x128xf32> to vector<8x128xf32>
    %11 = vector.shape_cast %8 : vector<8x128xf32> to vector<1x8x128xf32>
    tpu.vector_store %arg5[%c1, %c0_11, %c0_12], %11 {strides = array<i32>} : memref<2x8x128xf32, #tpu.memory_space<vmem>>, vector<1x8x128xf32>,
    return
  }
  func.func @transform_0(%arg0: i32) -> (i32, i32) {
    %c0_i32 = arith.constant 0 : i32
    %c0_i32_0 = arith.constant 0 : i32
    return %arg0, %c0_i32 : i32, i32
  }
  func.func @transform_1(%arg0: i32) -> (i32, i32) {
    %c0_i32 = arith.constant 0 : i32
    %c0_i32_0 = arith.constant 0 : i32
    return %arg0, %c0_i32 : i32, i32
  }
  func.func @transform_2(%arg0: i32) -> (i32, i32) {
    %c0_i32 = arith.constant 0 : i32
    %c0_i32_0 = arith.constant 0 : i32
    %c0_i32_1 = arith.constant 0 : i32
    return %c0_i32, %c0_i32_0 : i32, i32
  }
  func.func @transform_3(%arg0: i32) -> (i32, i32) {
    %c0_i32 = arith.constant 0 : i32
    %c0_i32_0 = arith.constant 0 : i32
    %c0_i32_1 = arith.constant 0 : i32
    return %c0_i32, %c0_i32_0 : i32, i32
  }
  func.func @transform_4(%arg0: i32) -> (i32, i32, i32) {
    %c0_i32 = arith.constant 0 : i32
    %c0_i32_0 = arith.constant 0 : i32
    %c0_i32_1 = arith.constant 0 : i32
    return %c0_i32, %arg0, %c0_i32_0 : i32, i32, i32
  }
}

</mosaic_0001>

<llo_original>
// kernel: tpu_custom_call.1
$region0: #{tpu_custom_call.1}
  #allocation0 [shape = 'u32[]', space=smem, size = 0x4, offset = 0x4, fixed_abs, tag = 'smem constant byte address 0x4 - core index']
  #allocation1 [shape = 'u32[144,128]{1,0:T(1,128)}', space=vmem, size = 0x12000, scoped, tag = 'internal scratch']
  %s0 = inlined_call_operand.vmem [shape: bf16[8,64], index: 0, kind: input, shape index: {}]
  %s1 = inlined_call_operand.vmem [shape: bf16[8,16], index: 1, kind: input, shape index: {}]
  %s2 = inlined_call_operand.vmem [shape: bf16[128,64], index: 2, kind: input, shape index: {}]
  %s3 = inlined_call_operand.vmem [shape: bf16[128,16], index: 3, kind: input, shape index: {}]
  %s4 = inlined_call_operand.hbm [shape: f32[2,8,128], index: 4, kind: output, shape index: {}]
  %s5 = sld [smem:[#allocation0]]
  $region26: #{tpu_custom_call.1} parent=0
    _
  %s7 = ssub.s32 1, %s5
  %s8 = scalar_select 0, %s7, %s5
  $region1: #{tpu_custom_call.1} parent=0
    #allocation2 [shape = 'u8[8192]{0}', space=vmem, size = 0x2000, scoped, tag = 'output window, operand 0, single buffered']
    #allocation3 [shape = 's32[1]{0}', space=sflag, size = 0x4, scoped, tag = 'scoped memory for tpu_custom_call.1']
    %9 = vsyncpa [#allocation3], 0
    // Predicated region
    $region2: #{tpu_custom_call.1} parent=1 // pred_check
      _
    $region3: #{tpu_custom_call.1} parent=1 // pred_check_branch
      %11 = sbr.rel (0) target = $region5
    $region4: #{tpu_custom_call.1} parent=1 // pred_region
      _
    $region5: #{tpu_custom_call.1} parent=1 // pred_fallthru
      _
    // Predicated region
    $region6: #{tpu_custom_call.1} parent=1 // pred_check
      _
    $region7: #{tpu_custom_call.1} parent=1 // pred_check_branch
      %13 = sbr.rel (0) target = $region9
    $region8: #{tpu_custom_call.1} parent=1 // pred_region
      _
    $region9: #{tpu_custom_call.1} parent=1 // pred_fallthru
      _
    // Predicated region
    $region10: #{tpu_custom_call.1} parent=1 // pred_check
      _
    $region11: #{tpu_custom_call.1} parent=1 // pred_check_branch
      %15 = sbr.rel (0) target = $region13
    $region12: #{tpu_custom_call.1} parent=1 // pred_region
      _
    $region13: #{tpu_custom_call.1} parent=1 // pred_fallthru
      _
    // Predicated region
    $region14: #{tpu_custom_call.1} parent=1 // pred_check
      _
    $region15: #{tpu_custom_call.1} parent=1 // pred_check_branch
      %17 = sbr.rel (0) target = $region17
    $region16: #{tpu_custom_call.1} parent=1 // pred_region
      _
    $region17: #{tpu_custom_call.1} parent=1 // pred_fallthru
      _
    %v19 = vld [vmem:[%s0] sm:$0xf]
    %v20 = vld [vmem:[%s2] sm:$0xf]
    %v21 = vld [vmem:[%s2 + $0x4] sm:$0xf]
    %v22 = vld [vmem:[%s2 + $0x8] sm:$0xf]
    %v23 = vld [vmem:[%s2 + $0xc] sm:$0xf]
    %v24 = vld [vmem:[%s2 + $0x10] sm:$0xf]
    %v25 = vld [vmem:[%s2 + $0x14] sm:$0xf]
    %v26 = vld [vmem:[%s2 + $0x18] sm:$0xf]
    %v27 = vld [vmem:[%s2 + $0x1c] sm:$0xf]
    %v28 = vld [vmem:[%s2 + $0x20] sm:$0xf]
    %v29 = vld [vmem:[%s2 + $0x24] sm:$0xf]
    %v30 = vld [vmem:[%s2 + $0x28] sm:$0xf]
    %v31 = vld [vmem:[%s2 + $0x2c] sm:$0xf]
    %v32 = vld [vmem:[%s2 + $0x30] sm:$0xf]
    %v33 = vld [vmem:[%s2 + $0x34] sm:$0xf]
    %v34 = vld [vmem:[%s2 + $0x38] sm:$0xf]
    %v35 = vld [vmem:[%s2 + $0x3c] sm:$0xf]
    %v52 = vunpack.c.l.b16 %v20
    %v53 = vunpack.c.l.b16 %v21
    %v54 = vunpack.c.l.b16 %v22
    %v55 = vunpack.c.l.b16 %v23
    %v56 = vunpack.c.l.b16 %v24
    %v57 = vunpack.c.l.b16 %v25
    %v58 = vunpack.c.l.b16 %v26
    %v59 = vunpack.c.l.b16 %v27
    %v60 = vunpack.c.l.b16 %v28
    %v61 = vunpack.c.l.b16 %v29
    %v62 = vunpack.c.l.b16 %v30
    %v63 = vunpack.c.l.b16 %v31
    %v64 = vunpack.c.l.b16 %v32
    %v65 = vunpack.c.l.b16 %v33
    %v66 = vunpack.c.l.b16 %v34
    %v67 = vunpack.c.l.b16 %v35
    %v68 = vpack.c.b16 %v53, %v52
    %v69 = vpack.c.b16 %v55, %v54
    %v70 = vpack.c.b16 %v57, %v56
    %v71 = vpack.c.b16 %v59, %v58
    %v72 = vpack.c.b16 %v61, %v60
    %v73 = vpack.c.b16 %v63, %v62
    %v74 = vpack.c.b16 %v65, %v64
    %v75 = vpack.c.b16 %v67, %v66
    %vm76 = vcmask 523264
    %v78 = vsel %vm76, %v19, 0
    %v81 = vsel %vm76, %v68, 0
    %v84 = vsel %vm76, %v69, 0
    %v87 = vsel %vm76, %v70, 0
    %v90 = vsel %vm76, %v71, 0
    %v93 = vsel %vm76, %v72, 0
    %v96 = vsel %vm76, %v73, 0
    %v99 = vsel %vm76, %v74, 0
    %v102 = vsel %vm76, %v75, 0
    %104 = vmatprep.subr.bf16.mxu0 0
    %105 = vmatpush1.bf16.xpose.msra.mxu0 %v102
    %106 = vmatprep.subr.bf16.mxu0 0
    %107 = vmatpush1.bf16.xpose.msra.mxu0 %v99
    %108 = vmatprep.subr.bf16.mxu0 0
    %109 = vmatpush1.bf16.xpose.msra.mxu0 %v96
    %110 = vmatprep.subr.bf16.mxu0 0
    %111 = vmatpush1.bf16.xpose.msra.mxu0 %v93
    %112 = vmatprep.subr.bf16.mxu0 0
    %113 = vmatpush1.bf16.xpose.msra.mxu0 %v90
    %114 = vmatprep.subr.bf16.mxu0 0
    %115 = vmatpush1.bf16.xpose.msra.mxu0 %v87
    %116 = vmatprep.subr.bf16.mxu0 0
    %117 = vmatpush1.bf16.xpose.msra.mxu0 %v84
    %118 = vmatprep.subr.bf16.mxu0 0
    %119 = vmatpush1.bf16.xpose.msra.mxu0 %v81
    %120 = vmatprep.subr.bf16.mxu0 0
    %121 = vmatpush2.bf16.xpose.msra.mxu0 0
    %122 = vmatprep.subr.bf16.mxu0 0
    %123 = vmatpush2.bf16.xpose.msra.mxu0 0
    %124 = vmatprep.subr.bf16.mxu0 0
    %125 = vmatpush2.bf16.xpose.msra.mxu0 0
    %126 = vmatprep.subr.bf16.mxu0 0
    %127 = vmatpush2.bf16.xpose.msra.mxu0 0
    %128 = vmatprep.subr.bf16.mxu0 0
    %129 = vmatpush2.bf16.xpose.msra.mxu0 0
    %130 = vmatprep.subr.bf16.mxu0 0
    %131 = vmatpush2.bf16.xpose.msra.mxu0 0
    %132 = vmatprep.subr.bf16.mxu0 0
    %133 = vmatpush2.bf16.xpose.msra.mxu0 0
    %134 = vmatprep.subr.bf16.mxu0 0
    %135 = vmatpush2.bf16.xpose.msra.mxu0 0
    %136 = vmatprep.mubr.bf16.mxu0 0
    %137 = vmatmul.mubr.bf16.gmra.mxu0 %v78
    %v138 = vpop.f32.mrf.mxu0
    %v139 = vadd.f32 0.0, %v138
    %v140 = vpop.f32.mrf.mxu0
    %v141 = vpop.f32.mrf.mxu0
    %v142 = vpop.f32.mrf.mxu0
    %143 = vdwg.mxu0
    %144 = vst [vmem:[#allocation2] sm:$0xff] %v139
    %v145 = vld [vmem:[%s1] sm:$0xf]
    %v146 = vld [vmem:[%s3] sm:$0xf]
    %v147 = vld [vmem:[%s3 + $0x4] sm:$0xf]
    %v148 = vld [vmem:[%s3 + $0x8] sm:$0xf]
    %v149 = vld [vmem:[%s3 + $0xc] sm:$0xf]
    %v150 = vld [vmem:[%s3 + $0x10] sm:$0xf]
    %v151 = vld [vmem:[%s3 + $0x14] sm:$0xf]
    %v152 = vld [vmem:[%s3 + $0x18] sm:$0xf]
    %v153 = vld [vmem:[%s3 + $0x1c] sm:$0xf]
    %v154 = vld [vmem:[%s3 + $0x20] sm:$0xf]
    %v155 = vld [vmem:[%s3 + $0x24] sm:$0xf]
    %v156 = vld [vmem:[%s3 + $0x28] sm:$0xf]
    %v157 = vld [vmem:[%s3 + $0x2c] sm:$0xf]
    %v158 = vld [vmem:[%s3 + $0x30] sm:$0xf]
    %v159 = vld [vmem:[%s3 + $0x34] sm:$0xf]
    %v160 = vld [vmem:[%s3 + $0x38] sm:$0xf]
    %v161 = vld [vmem:[%s3 + $0x3c] sm:$0xf]
    %v178 = vunpack.c.l.b16 %v146
    %v179 = vunpack.c.l.b16 %v147
    %v180 = vunpack.c.l.b16 %v148
    %v181 = vunpack.c.l.b16 %v149
    %v182 = vunpack.c.l.b16 %v150
    %v183 = vunpack.c.l.b16 %v151
    %v184 = vunpack.c.l.b16 %v152
    %v185 = vunpack.c.l.b16 %v153
    %v186 = vunpack.c.l.b16 %v154
    %v187 = vunpack.c.l.b16 %v155
    %v188 = vunpack.c.l.b16 %v156
    %v189 = vunpack.c.l.b16 %v157
    %v190 = vunpack.c.l.b16 %v158
    %v191 = vunpack.c.l.b16 %v159
    %v192 = vunpack.c.l.b16 %v160
    %v193 = vunpack.c.l.b16 %v161
    %v194 = vpack.c.b16 %v179, %v178
    %v195 = vpack.c.b16 %v181, %v180
    %v196 = vpack.c.b16 %v183, %v182
    %v197 = vpack.c.b16 %v185, %v184
    %v198 = vpack.c.b16 %v187, %v186
    %v199 = vpack.c.b16 %v189, %v188
    %v200 = vpack.c.b16 %v191, %v190
    %v201 = vpack.c.b16 %v193, %v192
    %vm202 = vcmask 130048
    %v204 = vsel %vm202, %v145, 0
    %v207 = vsel %vm202, %v194, 0
    %v210 = vsel %vm202, %v195, 0
    %v213 = vsel %vm202, %v196, 0
    %v216 = vsel %vm202, %v197, 0
    %v219 = vsel %vm202, %v198, 0
    %v222 = vsel %vm202, %v199, 0
    %v225 = vsel %vm202, %v200, 0
    %v228 = vsel %vm202, %v201, 0
    %230 = vmatprep.subr.bf16.mxu0 0
    %231 = vmatpush1.bf16.xpose.msra.mxu0 %v228
    %232 = vmatprep.subr.bf16.mxu0 0
    %233 = vmatpush1.bf16.xpose.msra.mxu0 %v225
    %234 = vmatprep.subr.bf16.mxu0 0
    %235 = vmatpush1.bf16.xpose.msra.mxu0 %v222
    %236 = vmatprep.subr.bf16.mxu0 0
    %237 = vmatpush1.bf16.xpose.msra.mxu0 %v219
    %238 = vmatprep.subr.bf16.mxu0 0
    %239 = vmatpush1.bf16.xpose.msra.mxu0 %v216
    %240 = vmatprep.subr.bf16.mxu0 0
    %241 = vmatpush1.bf16.xpose.msra.mxu0 %v213
    %242 = vmatprep.subr.bf16.mxu0 0
    %243 = vmatpush1.bf16.xpose.msra.mxu0 %v210
    %244 = vmatprep.subr.bf16.mxu0 0
    %245 = vmatpush1.bf16.xpose.msra.mxu0 %v207
    %246 = vmatprep.subr.bf16.mxu0 0
    %247 = vmatpush2.bf16.xpose.msra.mxu0 0
    %248 = vmatprep.subr.bf16.mxu0 0
    %249 = vmatpush2.bf16.xpose.msra.mxu0 0
    %250 = vmatprep.subr.bf16.mxu0 0
    %251 = vmatpush2.bf16.xpose.msra.mxu0 0
    %252 = vmatprep.subr.bf16.mxu0 0
    %253 = vmatpush2.bf16.xpose.msra.mxu0 0
    %254 = vmatprep.subr.bf16.mxu0 0
    %255 = vmatpush2.bf16.xpose.msra.mxu0 0
    %256 = vmatprep.subr.bf16.mxu0 0
    %257 = vmatpush2.bf16.xpose.msra.mxu0 0
    %258 = vmatprep.subr.bf16.mxu0 0
    %259 = vmatpush2.bf16.xpose.msra.mxu0 0
    %260 = vmatprep.subr.bf16.mxu0 0
    %261 = vmatpush2.bf16.xpose.msra.mxu0 0
    %262 = vmatprep.mubr.bf16.mxu0 0
    %263 = vmatmul.mubr.bf16.gmra.mxu0 %v204
    %v264 = vpop.f32.mrf.mxu0
    %v265 = vadd.f32 0.0, %v264
    %v266 = vpop.f32.mrf.mxu0
    %v267 = vpop.f32.mrf.mxu0
    %v268 = vpop.f32.mrf.mxu0
    %269 = vdwg.mxu0
    %s270 = scalar_lea.vmem [#allocation2], 8
    %271 = vst [vmem:[%s270] sm:$0xff] %v265
    // Predicated region
    $region18: #{tpu_custom_call.1} parent=1 // pred_check
      _
    $region19: #{tpu_custom_call.1} parent=1 // pred_check_branch
      %273 = sbr.rel (0) target = $region21
    $region20: #{tpu_custom_call.1} parent=1 // pred_region
      %s275 = ssub.s32 256, 256
      %276 = vsyncadd [#allocation3], %s275
      %s277 = sshll.u32 [#allocation2], 4
      %s278 = int_to_ptr.vmem [resolvable:$true] %s277
      %283 = dma.vmem_to_hbm [thread:$0]  %s278, 256, %s4, [#allocation3], 128, 128, 8
    $region21: #{tpu_custom_call.1} parent=1 // pred_fallthru
      _
    // Predicated region
    $region22: #{tpu_custom_call.1} parent=1 // pred_check
      _
    $region23: #{tpu_custom_call.1} parent=1 // pred_check_branch
      %285 = sbr.rel (0) target = $region25
    $region24: #{tpu_custom_call.1} parent=1 // pred_region
      %286 = dma.done [#allocation3], 256
    $region25: #{tpu_custom_call.1} parent=1 // pred_fallthru
      _
    %287 = vsyncpa [#allocation3], 1

</llo_original>
